<compile_context>
chip_gen: v5e
topology: v5e:2x2
jax: 0.10.0
libtpu: 0.0.40
codegen_flags: <defaults>
</compile_context>

<pallas_src>
import functools

import jax
import jax.numpy as jnp
from jax.experimental import pallas as pl
from jax.experimental.pallas import tpu as pltpu


def _round_up(n, m):
    return ((n + m - 1) // m) * m


def nfm_score_kernel(x_ref, wfm_ref, w1_ref, b1_ref, w2_ref, b2_ref,
                     h_ref, wlin_ref, blin_ref, out_ref):
    x = x_ref[...]                                        # (TB, F) bf16

    # --- FM bi-interaction pooling, fused into one K=2F MXU matmul --------
    #   [x, x*x] @ [[E, 0], [0, E*E]]  =  [x @ E, x^2 @ E^2]
    xcat = jnp.concatenate([x, x * x], axis=-1)           # (TB, 2F) bf16
    fm = jnp.dot(xcat, wfm_ref[...],
                 preferred_element_type=jnp.float32)      # (TB, 2D) f32
    d = fm.shape[-1] // 2
    xe = fm[:, :d]
    x2e2 = fm[:, d:]
    z = 0.5 * (xe * xe - x2e2)                            # (TB, D) f32

    # --- NFM hidden MLP (Linear -> ReLU; message dropout = identity @ eval)
    z = jnp.dot(z.astype(jnp.bfloat16), w1_ref[...],
                preferred_element_type=jnp.float32) + b1_ref[...]
    z = jnp.maximum(z, 0.0)
    z = jnp.dot(z.astype(jnp.bfloat16), w2_ref[...],
                preferred_element_type=jnp.float32) + b2_ref[...]
    z = jnp.maximum(z, 0.0)                               # (TB, H2) f32

    # --- projection head + first-order linear term (VPU mul + lane reduce,
    #     instead of two N=1 MXU matmuls) -----------------------------------
    y = jnp.sum(z * h_ref[...], axis=-1, keepdims=True)                    # (TB, 1)
    y = y + jnp.sum(x.astype(jnp.float32) * wlin_ref[...],
                    axis=-1, keepdims=True)
    # Note: (TB, 1) store is lane-masked; write volume is tiny vs. the x read,
    # so the lane-dense output restructuring was skipped (low priority).
    out_ref[...] = y + blin_ref[...]


def _vmem_limit_bytes(tb, f, d, h1, h2):
    bf16, f32 = 2, 4
    w_bytes = (2 * f) * (2 * d) * bf16 + d * h1 * bf16 + h1 * h2 * bf16
    w_bytes += (h1 + 2 * h2 + f + 1) * f32
    io_bytes = tb * f * bf16 + tb * f32
    tmp_bytes = tb * (2 * f * bf16 + (2 * d + d + h1 + h2 + f) * f32)
    total = 2 * (w_bytes + io_bytes) + tmp_bytes          # x2: double buffering
    return int(min(max(2 * total, 8 * 2 ** 20), 48 * 2 ** 20))


@functools.partial(jax.jit, static_argnames=("tb",))
def nfm_calc_score(x, feature_embed, w1, b1, w2, b2, h, w_lin, b_lin, *, tb=4096):
    """NFM.calc_score (inference).

    x             : (B, F)   feature_values (dense float multi-hot)
    feature_embed : (F, D)
    w1, b1        : (D, H1), (H1,)    hidden layer 0
    w2, b2        : (H1, H2), (H2,)   hidden layer 1
    h             : (H2,)             projection head (no bias)
    w_lin, b_lin  : (F,), ()          first-order linear term
    returns       : (B,)
    """
    b_sz, f = x.shape
    d = feature_embed.shape[1]
    h1 = w1.shape[1]
    h2 = w2.shape[1]

    # Fused block-diagonal FM weight [[E, 0], [0, E*E]] -> (2F, 2D), bf16.
    e = feature_embed.astype(jnp.float32)
    zeros = jnp.zeros_like(e)
    wfm = jnp.concatenate(
        [jnp.concatenate([e, zeros], axis=1),
         jnp.concatenate([zeros, e * e], axis=1)], axis=0).astype(jnp.bfloat16)

    # Batch tiling: pad ragged batch to a multiple of the 8-aligned tile.
    tb_eff = min(tb, _round_up(b_sz, 8))
    b_pad = _round_up(b_sz, tb_eff)
    x_p = x if b_pad == b_sz else jnp.pad(x, ((0, b_pad - b_sz), (0, 0)))
    x_p = x_p.astype(jnp.bfloat16)        # 0/1 multi-hot -> exact in bf16

    grid = (b_pad // tb_eff,)
    const = lambda i: (0, 0)

    out = pl.pallas_call(
        nfm_score_kernel,
        out_shape=jax.ShapeDtypeStruct((b_pad, 1), jnp.float32),
        grid=grid,
        in_specs=[
            pl.BlockSpec((tb_eff, f), lambda i: (i, 0)),      # x tile (pipelined)
            pl.BlockSpec((2 * f, 2 * d), const),              # Wfm (resident)
            pl.BlockSpec((d, h1), const),                     # W1
            pl.BlockSpec((1, h1), const),                     # b1
            pl.BlockSpec((h1, h2), const),                    # W2
            pl.BlockSpec((1, h2), const),                     # b2
            pl.BlockSpec((1, h2), const),                     # h row
            pl.BlockSpec((1, f), const),                      # w_lin row
            pl.BlockSpec((1, 1), const),                      # b_lin
        ],
        out_specs=pl.BlockSpec((tb_eff, 1), lambda i: (i, 0)),
        compiler_params=pltpu.CompilerParams(
            dimension_semantics=("parallel",),
            vmem_limit_bytes=_vmem_limit_bytes(tb_eff, f, d, h1, h2)),
    )(
        x_p,
        wfm,
        w1.astype(jnp.bfloat16),
        b1.reshape(1, h1).astype(jnp.float32),
        w2.astype(jnp.bfloat16),
        b2.reshape(1, h2).astype(jnp.float32),
        h.reshape(1, h2).astype(jnp.float32),
        w_lin.reshape(1, f).astype(jnp.float32),
        b_lin.reshape(1, 1).astype(jnp.float32),
    )
    return out[:b_sz, 0]   # .squeeze()


def xavier_uniform(key, shape):
    # matches nn.init.xavier_uniform_ for a 2-D (fan_out, fan_in) weight
    fan_out, fan_in = shape
    bound = (6.0 / (fan_in + fan_out)) ** 0.5
    return jax.random.uniform(key, shape, jnp.float32, -bound, bound)


def reference_score(x, feature_embed, w1, b1, w2, b2, h, w_lin, b_lin):
    sum_sq = jnp.square(x @ feature_embed)
    sq_sum = jnp.square(x) @ jnp.square(feature_embed)
    z = 0.5 * (sum_sq - sq_sum)
    z = jnp.maximum(z @ w1 + b1[None, :], 0.0)
    z = jnp.maximum(z @ w2 + b2[None, :], 0.0)
    y = z @ h[:, None] + (x @ w_lin[:, None] + b_lin)
    return y[:, 0]


if __name__ == "__main__":
    # --- synthetic NFM config (model_type='nfm') ------------------------
    n_users, n_entities = 16, 48
    n_features = n_users + n_entities          # 64
    embed_dim = 32
    hidden_dim_list = [embed_dim, 32, 16]      # embed_dim + eval(hidden_dim_list)

    key = jax.random.PRNGKey(0)
    keys = jax.random.split(key, 8)

    feature_embed = xavier_uniform(keys[0], (n_features, embed_dim))               # (F, D)
    w1 = xavier_uniform(keys[1], (hidden_dim_list[1], hidden_dim_list[0])).T       # (D, H1)
    b1 = 0.1 * jax.random.normal(keys[6], (hidden_dim_list[1],), jnp.float32)
    w2 = xavier_uniform(keys[2], (hidden_dim_list[2], hidden_dim_list[1])).T       # (H1, H2)
    b2 = 0.1 * jax.random.normal(keys[7], (hidden_dim_list[2],), jnp.float32)
    h = xavier_uniform(keys[3], (1, hidden_dim_list[2]))[0]                        # (H2,)
    w_lin = xavier_uniform(keys[4], (1, n_features))[0]                            # (F,)
    b_lin = jnp.asarray(0.03, jnp.float32)

    params = (feature_embed, w1, b1, w2, b2, h, w_lin, b_lin)

    # Input: sparse-ish multi-hot feature values (dense float representation).
    # Two cases: ragged small batch (pad path) and multi-tile grid (grid > 1).
    for batch, tb in ((10, 4096), (300, 128)):
        xk = jax.random.fold_in(keys[5], batch)
        x = (jax.random.uniform(xk, (batch, n_features)) < 0.1).astype(jnp.float32)

        scores = nfm_calc_score(x, *params, tb=tb)
        jax.block_until_ready(scores)

        ref = reference_score(x, *params)
        assert scores.shape == (batch,)
        # bf16 weights inside the kernel -> relaxed tolerance vs. f32 reference.
        assert jnp.allclose(scores, ref, atol=5e-2, rtol=5e-2), (
            float(jnp.max(jnp.abs(scores - ref))))

    # TODO(synk): calc_loss (pairwise BPR log-sigmoid loss + L2) is the
    # training-time reduction over two score vectors; only the inference
    # calc_score path is implemented as the Pallas hot-path kernel here.
    # TODO(synk): for realistic KG sizes (n_features >> VMEM), replace the
    # dense (B, F) x with a PrefetchScalarGridSpec sparse gather of the active
    # embedding rows (feature_values is a torch.sparse tensor in the original).
    print("KERNEL_OK")
</pallas_src>

<mosaic_0001>
module attributes {stable_mosaic.version = 11 : i64} {
  func.func @nfm_score_kernel(%arg0: i32, %arg1: memref<16x64xbf16, #tpu.memory_space<vmem>>, %arg2: memref<128x64xbf16, #tpu.memory_space<vmem>>, %arg3: memref<32x32xbf16, #tpu.memory_space<vmem>>, %arg4: memref<1x32xf32, #tpu.memory_space<vmem>>, %arg5: memref<32x16xbf16, #tpu.memory_space<vmem>>, %arg6: memref<1x16xf32, #tpu.memory_space<vmem>>, %arg7: memref<1x16xf32, #tpu.memory_space<vmem>>, %arg8: memref<1x64xf32, #tpu.memory_space<vmem>>, %arg9: memref<1x1xf32, #tpu.memory_space<vmem>>, %arg10: memref<16x1xf32, #tpu.memory_space<vmem>>) attributes {dimension_semantics = [#tpu.dimension_semantics<parallel>], iteration_bounds = array<i64: 1>, scalar_prefetch = 0 : i64, scratch_operands = 0 : i64, tpu.core_type = #tpu.core_type<tc>, window_params = [{transform_indices = @transform_0, window_bounds = array<i64: 16, 64>}, {pipeline_mode = #tpu.pipeline_mode<synchronous>, transform_indices = @transform_1, window_bounds = array<i64: 128, 64>}, {pipeline_mode = #tpu.pipeline_mode<synchronous>, transform_indices = @transform_2, window_bounds = array<i64: 32, 32>}, {pipeline_mode = #tpu.pipeline_mode<synchronous>, transform_indices = @transform_3, window_bounds = array<i64: 1, 32>}, {pipeline_mode = #tpu.pipeline_mode<synchronous>, transform_indices = @transform_4, window_bounds = array<i64: 32, 16>}, {pipeline_mode = #tpu.pipeline_mode<synchronous>, transform_indices = @transform_5, window_bounds = array<i64: 1, 16>}, {pipeline_mode = #tpu.pipeline_mode<synchronous>, transform_indices = @transform_6, window_bounds = array<i64: 1, 16>}, {pipeline_mode = #tpu.pipeline_mode<synchronous>, transform_indices = @transform_7, window_bounds = array<i64: 1, 64>}, {pipeline_mode = #tpu.pipeline_mode<synchronous>, transform_indices = @transform_8, window_bounds = array<i64: 1, 1>}, {transform_indices = @transform_9, window_bounds = array<i64: 16, 1>}]} {
    %c0 = arith.constant 0 : index
    %c0_0 = arith.constant 0 : index
    %0 = vector.load %arg1[%c0, %c0_0] : memref<16x64xbf16, #tpu.memory_space<vmem>>, vector<16x64xbf16>
    %1 = arith.mulf %0, %0 : vector<16x64xbf16>
    %2 = tpu.concatenate %0, %1 in 1 : vector<16x64xbf16>, vector<16x64xbf16> -> vector<16x128xbf16>
    %c0_1 = arith.constant 0 : index
    %c0_2 = arith.constant 0 : index
    %3 = vector.load %arg2[%c0_1, %c0_2] : memref<128x64xbf16, #tpu.memory_space<vmem>>, vector<128x64xbf16>
    %cst = arith.constant dense<0.000000e+00> : vector<16x64xf32>
    %4 = tpu.matmul %2, %3, %cst {dimension_numbers = #tpu.dot_dimension_numbers<[1], [0], [0], [1], [0, 0, 1, 1], [], []>} : vector<16x128xbf16>, vector<128x64xbf16>, vector<16x64xf32> -> vector<16x64xf32>
    %5 = vector.extract_strided_slice %4 {offsets = [0, 0], sizes = [16, 32], strides = [1, 1]} : vector<16x64xf32> to vector<16x32xf32>
    %6 = vector.extract_strided_slice %4 {offsets = [0, 32], sizes = [16, 32], strides = [1, 1]} : vector<16x64xf32> to vector<16x32xf32>
    %7 = arith.mulf %5, %5 : vector<16x32xf32>
    %8 = arith.subf %7, %6 : vector<16x32xf32>
    %cst_3 = arith.constant 5.000000e-01 : f32
    %9 = vector.broadcast %cst_3 : f32 to vector<16x32xf32>
    %10 = arith.mulf %9, %8 : vector<16x32xf32>
    %11 = arith.truncf %10 : vector<16x32xf32> to vector<16x32xbf16>
    %c0_4 = arith.constant 0 : index
    %c0_5 = arith.constant 0 : index
    %12 = vector.load %arg3[%c0_4, %c0_5] : memref<32x32xbf16, #tpu.memory_space<vmem>>, vector<32x32xbf16>
    %cst_6 = arith.constant dense<0.000000e+00> : vector<16x32xf32>
    %13 = tpu.matmul %11, %12, %cst_6 {dimension_numbers = #tpu.dot_dimension_numbers<[1], [0], [0], [1], [0, 0, 1, 1], [], []>} : vector<16x32xbf16>, vector<32x32xbf16>, vector<16x32xf32> -> vector<16x32xf32>
    %c0_7 = arith.constant 0 : index
    %c0_8 = arith.constant 0 : index
    %14 = vector.load %arg4[%c0_7, %c0_8] : memref<1x32xf32, #tpu.memory_space<vmem>>, vector<1x32xf32>
    %15 = vector.broadcast %14 : vector<1x32xf32> to vector<16x32xf32>
    %16 = arith.addf %13, %15 : vector<16x32xf32>
    %cst_9 = arith.constant 0.000000e+00 : f32
    %17 = vector.broadcast %cst_9 : f32 to vector<16x32xf32>
    %18 = arith.maximumf %16, %17 : vector<16x32xf32>
    %19 = arith.truncf %18 : vector<16x32xf32> to vector<16x32xbf16>
    %c0_10 = arith.constant 0 : index
    %c0_11 = arith.constant 0 : index
    %20 = vector.load %arg5[%c0_10, %c0_11] : memref<32x16xbf16, #tpu.memory_space<vmem>>, vector<32x16xbf16>
    %cst_12 = arith.constant dense<0.000000e+00> : vector<16x16xf32>
    %21 = tpu.matmul %19, %20, %cst_12 {dimension_numbers = #tpu.dot_dimension_numbers<[1], [0], [0], [1], [0, 0, 1, 1], [], []>} : vector<16x32xbf16>, vector<32x16xbf16>, vector<16x16xf32> -> vector<16x16xf32>
    %c0_13 = arith.constant 0 : index
    %c0_14 = arith.constant 0 : index
    %22 = vector.load %arg6[%c0_13, %c0_14] : memref<1x16xf32, #tpu.memory_space<vmem>>, vector<1x16xf32>
    %23 = vector.broadcast %22 : vector<1x16xf32> to vector<16x16xf32>
    %24 = arith.addf %21, %23 : vector<16x16xf32>
    %cst_15 = arith.constant 0.000000e+00 : f32
    %25 = vector.broadcast %cst_15 : f32 to vector<16x16xf32>
    %26 = arith.maximumf %24, %25 : vector<16x16xf32>
    %c0_16 = arith.constant 0 : index
    %c0_17 = arith.constant 0 : index
    %27 = vector.load %arg7[%c0_16, %c0_17] : memref<1x16xf32, #tpu.memory_space<vmem>>, vector<1x16xf32>
    %28 = vector.broadcast %27 : vector<1x16xf32> to vector<16x16xf32>
    %29 = arith.mulf %26, %28 : vector<16x16xf32>
    %cst_18 = arith.constant dense<0.000000e+00> : vector<16xf32>
    %30 = vector.multi_reduction <add>, %29, %cst_18 [1] : vector<16x16xf32> to vector<16xf32>
    %31 = vector.shape_cast %30 : vector<16xf32> to vector<16x1xf32>
    %32 = arith.extf %0 : vector<16x64xbf16> to vector<16x64xf32>
    %c0_19 = arith.constant 0 : index
    %c0_20 = arith.constant 0 : index
    %33 = vector.load %arg8[%c0_19, %c0_20] : memref<1x64xf32, #tpu.memory_space<vmem>>, vector<1x64xf32>
    %34 = vector.broadcast %33 : vector<1x64xf32> to vector<16x64xf32>
    %35 = arith.mulf %32, %34 : vector<16x64xf32>
    %cst_21 = arith.constant dense<0.000000e+00> : vector<16xf32>
    %36 = vector.multi_reduction <add>, %35, %cst_21 [1] : vector<16x64xf32> to vector<16xf32>
    %37 = vector.shape_cast %36 : vector<16xf32> to vector<16x1xf32>
    %38 = arith.addf %31, %37 : vector<16x1xf32>
    %c0_22 = arith.constant 0 : index
    %c0_23 = arith.constant 0 : index
    %39 = vector.load %arg9[%c0_22, %c0_23] : memref<1x1xf32, #tpu.memory_space<vmem>>, vector<1x1xf32>
    %40 = vector.broadcast %39 : vector<1x1xf32> to vector<16x1xf32>
    %41 = arith.addf %38, %40 : vector<16x1xf32>
    %c0_24 = arith.constant 0 : index
    %c0_25 = arith.constant 0 : index
    %42 = vector.load %arg10[%c0_24, %c0_25] : memref<16x1xf32, #tpu.memory_space<vmem>>, vector<16x1xf32>
    tpu.vector_store %arg10[%c0_24, %c0_25], %41 {strides = array<i32>} : memref<16x1xf32, #tpu.memory_space<vmem>>, vector<16x1xf32>,
    return
  }
  func.func @transform_0(%arg0: i32) -> (i32, i32) {
    %c0_i32 = arith.constant 0 : i32
    %c0_i32_0 = arith.constant 0 : i32
    return %arg0, %c0_i32 : i32, i32
  }
  func.func @transform_1(%arg0: i32) -> (i32, i32) {
    %c0_i32 = arith.constant 0 : i32
    %c0_i32_0 = arith.constant 0 : i32
    %c0_i32_1 = arith.constant 0 : i32
    return %c0_i32, %c0_i32_0 : i32, i32
  }
  func.func @transform_2(%arg0: i32) -> (i32, i32) {
    %c0_i32 = arith.constant 0 : i32
    %c0_i32_0 = arith.constant 0 : i32
    %c0_i32_1 = arith.constant 0 : i32
    return %c0_i32, %c0_i32_0 : i32, i32
  }
  func.func @transform_3(%arg0: i32) -> (i32, i32) {
    %c0_i32 = arith.constant 0 : i32
    %c0_i32_0 = arith.constant 0 : i32
    %c0_i32_1 = arith.constant 0 : i32
    return %c0_i32, %c0_i32_0 : i32, i32
  }
  func.func @transform_4(%arg0: i32) -> (i32, i32) {
    %c0_i32 = arith.constant 0 : i32
    %c0_i32_0 = arith.constant 0 : i32
    %c0_i32_1 = arith.constant 0 : i32
    return %c0_i32, %c0_i32_0 : i32, i32
  }
  func.func @transform_5(%arg0: i32) -> (i32, i32) {
    %c0_i32 = arith.constant 0 : i32
    %c0_i32_0 = arith.constant 0 : i32
    %c0_i32_1 = arith.constant 0 : i32
    return %c0_i32, %c0_i32_0 : i32, i32
  }
  func.func @transform_6(%arg0: i32) -> (i32, i32) {
    %c0_i32 = arith.constant 0 : i32
    %c0_i32_0 = arith.constant 0 : i32
    %c0_i32_1 = arith.constant 0 : i32
    return %c0_i32, %c0_i32_0 : i32, i32
  }
  func.func @transform_7(%arg0: i32) -> (i32, i32) {
    %c0_i32 = arith.constant 0 : i32
    %c0_i32_0 = arith.constant 0 : i32
    %c0_i32_1 = arith.constant 0 : i32
    return %c0_i32, %c0_i32_0 : i32, i32
  }
  func.func @transform_8(%arg0: i32) -> (i32, i32) {
    %c0_i32 = arith.constant 0 : i32
    %c0_i32_0 = arith.constant 0 : i32
    %c0_i32_1 = arith.constant 0 : i32
    return %c0_i32, %c0_i32_0 : i32, i32
  }
  func.func @transform_9(%arg0: i32) -> (i32, i32) {
    %c0_i32 = arith.constant 0 : i32
    %c0_i32_0 = arith.constant 0 : i32
    return %arg0, %c0_i32 : i32, i32
  }
}

</mosaic_0001>

<llo_original>
// kernel: mul.1
$region0: #{mul.1}
  #allocation0 [shape = 's32[1]{0}', space=sflag, size = 0x4, scoped, tag = 'scoped memory for mul.1']
  %s0 = inlined_call_operand.vmem [shape: f32[64,32], index: 0, kind: input, shape index: {}, may-alias: {0,1}]
  %s1 = inlined_call_operand.vmem [shape: f32[64,32], index: 1, kind: input, shape index: {}, may-alias: {0,1}]
  %s2 = inlined_call_operand.vmem [shape: bf16[64,32], index: 2, kind: output, shape index: {}]
  %v3 = vld [vmem:[%s0] sm:$0xff]
  %v4 = vld [vmem:[%s1] sm:$0xff]
  %5 = xla_tuple %v3, %v4
  %6 = xla_tuple %5
  %v7 = vmul.f32 %v3, %v4
  %8 = xla_tuple %v7
  %v9 = vpack.c.bf16 0.0, %v7
  %10 = vst [vmem:[%s2] sm:$0xf] %v9
  %s11 = scalar_lea.vmem %s0, 8
  %v12 = vld [vmem:[%s11] sm:$0xff]
  %s13 = scalar_lea.vmem %s1, 8
  %v14 = vld [vmem:[%s13] sm:$0xff]
  %15 = xla_tuple %v12, %v14
  %16 = xla_tuple %15
  %v17 = vmul.f32 %v12, %v14
  %18 = xla_tuple %v17
  %s19 = scalar_lea.vmem %s2, 4
  %v20 = vpack.c.bf16 0.0, %v17
  %21 = vst [vmem:[%s19] sm:$0xf] %v20
  %s22 = scalar_lea.vmem %s0, 16
  %v23 = vld [vmem:[%s22] sm:$0xff]
  %s24 = scalar_lea.vmem %s1, 16
  %v25 = vld [vmem:[%s24] sm:$0xff]
  %26 = xla_tuple %v23, %v25
  %27 = xla_tuple %26
  %v28 = vmul.f32 %v23, %v25
  %29 = xla_tuple %v28
  %s30 = scalar_lea.vmem %s2, 8
  %v31 = vpack.c.bf16 0.0, %v28
  %32 = vst [vmem:[%s30] sm:$0xf] %v31
  %s33 = scalar_lea.vmem %s0, 24
  %v34 = vld [vmem:[%s33] sm:$0xff]
  %s35 = scalar_lea.vmem %s1, 24
  %v36 = vld [vmem:[%s35] sm:$0xff]
  %37 = xla_tuple %v34, %v36
  %38 = xla_tuple %37
  %v39 = vmul.f32 %v34, %v36
  %40 = xla_tuple %v39
  %s41 = scalar_lea.vmem %s2, 12
  %v42 = vpack.c.bf16 0.0, %v39
  %43 = vst [vmem:[%s41] sm:$0xf] %v42

// kernel: nfm_calc_score.1
$region0: #{nfm_calc_score.1}
  #allocation0 [shape = 'u32[]', space=smem, size = 0x4, offset = 0x4, fixed_abs, tag = 'smem constant byte address 0x4 - core index']
  #allocation1 [shape = 'u32[72,128]{1,0:T(1,128)}', space=vmem, size = 0x9000, scoped, tag = 'internal scratch']
  #allocation2 [shape = 'f32[1,1]{1,0:T(1,128)S(1)}', space=vmem, size = 0x200, scoped, tag = 'scoped memory for nfm_calc_score.1']
  %s0 = inlined_call_operand.vmem [shape: bf16[16,64], index: 0, kind: input, shape index: {}]
  %s1 = inlined_call_operand.vmem [shape: bf16[128,64], index: 1, kind: input, shape index: {}]
  %s2 = inlined_call_operand.vmem [shape: bf16[32,32], index: 2, kind: input, shape index: {}]
  %s3 = inlined_call_operand.vmem [shape: f32[1,32], index: 3, kind: input, shape index: {}]
  %s4 = inlined_call_operand.vmem [shape: bf16[32,16], index: 4, kind: input, shape index: {}]
  %s5 = inlined_call_operand.vmem [shape: f32[1,16], index: 5, kind: input, shape index: {}]
  %s6 = inlined_call_operand.vmem [shape: f32[1,16], index: 6, kind: input, shape index: {}]
  %s7 = inlined_call_operand.vmem [shape: f32[1,64], index: 7, kind: input, shape index: {}]
  %s8 = inlined_call_operand.<no memory space> [shape: f32[1,1], index: 8, kind: input, shape index: {}]
  %s9 = inlined_call_operand.vmem [shape: f32[16,1], index: 9, kind: output, shape index: {}]
  %s10 = sld [smem:[#allocation0]]
  $region46: #{nfm_calc_score.1} parent=0
    _
  %s12 = ssub.s32 1, %s10
  %s13 = scalar_select 0, %s12, %s10
  %v14 = vstv %s8
  %15 = vst [vmem:[#allocation2] sm:$0x1] %v14
  // Predicated region
  $region2: #{nfm_calc_score.1} parent=0 // pred_check
    _
  $region3: #{nfm_calc_score.1} parent=0 // pred_check_branch
    %17 = sbr.rel (0) target = $region5
  $region4: #{nfm_calc_score.1} parent=0 // pred_region
    _
  $region5: #{nfm_calc_score.1} parent=0 // pred_fallthru
    _
  // Predicated region
  $region6: #{nfm_calc_score.1} parent=0 // pred_check
    _
  $region7: #{nfm_calc_score.1} parent=0 // pred_check_branch
    %19 = sbr.rel (0) target = $region9
  $region8: #{nfm_calc_score.1} parent=0 // pred_region
    _
  $region9: #{nfm_calc_score.1} parent=0 // pred_fallthru
    _
  // Predicated region
  $region10: #{nfm_calc_score.1} parent=0 // pred_check
    _
  $region11: #{nfm_calc_score.1} parent=0 // pred_check_branch
    %21 = sbr.rel (0) target = $region13
  $region12: #{nfm_calc_score.1} parent=0 // pred_region
    _
  $region13: #{nfm_calc_score.1} parent=0 // pred_fallthru
    _
  // Predicated region
  $region14: #{nfm_calc_score.1} parent=0 // pred_check
    _
  $region15: #{nfm_calc_score.1} parent=0 // pred_check_branch
    %23 = sbr.rel (0) target = $region17
  $region16: #{nfm_calc_score.1} parent=0 // pred_region
    _
  $region17: #{nfm_calc_score.1} parent=0 // pred_fallthru
    _
  // Predicated region
  $region18: #{nfm_calc_score.1} parent=0 // pred_check
    _
  $region19: #{nfm_calc_score.1} parent=0 // pred_check_branch
    %25 = sbr.rel (0) target = $region21
  $region20: #{nfm_calc_score.1} parent=0 // pred_region
    _
  $region21: #{nfm_calc_score.1} parent=0 // pred_fallthru
    _
  // Predicated region
  $region22: #{nfm_calc_score.1} parent=0 // pred_check
    _
  $region23: #{nfm_calc_score.1} parent=0 // pred_check_branch
    %27 = sbr.rel (0) target = $region25
  $region24: #{nfm_calc_score.1} parent=0 // pred_region
    _
  $region25: #{nfm_calc_score.1} parent=0 // pred_fallthru
    _
  // Predicated region
  $region26: #{nfm_calc_score.1} parent=0 // pred_check
    _
  $region27: #{nfm_calc_score.1} parent=0 // pred_check_branch
    %29 = sbr.rel (0) target = $region29
  $region28: #{nfm_calc_score.1} parent=0 // pred_region
    _
  $region29: #{nfm_calc_score.1} parent=0 // pred_fallthru
    _
  // Predicated region
  $region30: #{nfm_calc_score.1} parent=0 // pred_check
    _
  $region31: #{nfm_calc_score.1} parent=0 // pred_check_branch
    %31 = sbr.rel (0) target = $region33
  $region32: #{nfm_calc_score.1} parent=0 // pred_region
    _
  $region33: #{nfm_calc_score.1} parent=0 // pred_fallthru
    _
  // Predicated region
  $region34: #{nfm_calc_score.1} parent=0 // pred_check
    _
  $region35: #{nfm_calc_score.1} parent=0 // pred_check_branch
    %33 = sbr.rel (0) target = $region37
  $region36: #{nfm_calc_score.1} parent=0 // pred_region
    _
  $region37: #{nfm_calc_score.1} parent=0 // pred_fallthru
    _
  %v35 = vld [vmem:[%s0] sm:$0xf]
  %v36 = vld [vmem:[%s0 + $0x4] sm:$0xf]
  %v37 = vunpack.c.l.bf16 %v35
  %v38 = vunpack.c.l.bf16 %v36
  %v39 = vmul.f32 %v37, %v37
  %v40 = vmul.f32 %v38, %v38
  %v41 = vpack.c.bf16 %v39, %v39
  %v42 = vpack.c.bf16 %v40, %v40
  %v45 = vunpack.c.l.b16 %v35
  %v46 = vunpack.c.l.b16 %v36
  %v47 = vpack.c.b16 %v46, %v45
  %v50 = vunpack.c.l.b16 %v41
  %v51 = vunpack.c.l.b16 %v42
  %v52 = vpack.c.b16 %v51, %v50
  %53 = vrot.lane.b32.xlu0 %v52, 64
  %v54 = vpop.permute.xlu0 %53
  %vm55 = vcmask 523264
  %v58 = vsel %vm55, %v47, %v54
  %v60 = vld [vmem:[%s1] sm:$0xf]
  %v61 = vld [vmem:[%s1 + $0x4] sm:$0xf]
  %v62 = vld [vmem:[%s1 + $0x8] sm:$0xf]
  %v63 = vld [vmem:[%s1 + $0xc] sm:$0xf]
  %v64 = vld [vmem:[%s1 + $0x10] sm:$0xf]
  %v65 = vld [vmem:[%s1 + $0x14] sm:$0xf]
  %v66 = vld [vmem:[%s1 + $0x18] sm:$0xf]
  %v67 = vld [vmem:[%s1 + $0x1c] sm:$0xf]
  %v68 = vld [vmem:[%s1 + $0x20] sm:$0xf]
  %v69 = vld [vmem:[%s1 + $0x24] sm:$0xf]
  %v70 = vld [vmem:[%s1 + $0x28] sm:$0xf]
  %v71 = vld [vmem:[%s1 + $0x2c] sm:$0xf]
  %v72 = vld [vmem:[%s1 + $0x30] sm:$0xf]
  %v73 = vld [vmem:[%s1 + $0x34] sm:$0xf]
  %v74 = vld [vmem:[%s1 + $0x38] sm:$0xf]
  %v75 = vld [vmem:[%s1 + $0x3c] sm:$0xf]
  %v92 = vunpack.c.l.b16 %v60
  %v93 = vunpack.c.l.b16 %v61
  %v94 = vunpack.c.l.b16 %v62
  %v95 = vunpack.c.l.b16 %v63
  %v96 = vunpack.c.l.b16 %v64
  %v97 = vunpack.c.l.b16 %v65
  %v98 = vunpack.c.l.b16 %v66
  %v99 = vunpack.c.l.b16 %v67
  %v100 = vunpack.c.l.b16 %v68
  %v101 = vunpack.c.l.b16 %v69
  %v102 = vunpack.c.l.b16 %v70
  %v103 = vunpack.c.l.b16 %v71
  %v104 = vunpack.c.l.b16 %v72
  %v105 = vunpack.c.l.b16 %v73
  %v106 = vunpack.c.l.b16 %v74
  %v107 = vunpack.c.l.b16 %v75
  %v108 = vpack.c.b16 %v93, %v92
  %v109 = vpack.c.b16 %v95, %v94
  %v110 = vpack.c.b16 %v97, %v96
  %v111 = vpack.c.b16 %v99, %v98
  %v112 = vpack.c.b16 %v101, %v100
  %v113 = vpack.c.b16 %v103, %v102
  %v114 = vpack.c.b16 %v105, %v104
  %v115 = vpack.c.b16 %v107, %v106
  %124 = vmatpush.bf16.msra.mxu0 %v115
  %125 = vmatpush.bf16.msra.mxu0 %v114
  %126 = vmatpush.bf16.msra.mxu0 %v113
  %127 = vmatpush.bf16.msra.mxu0 %v112
  %128 = vmatpush.bf16.msra.mxu0 %v111
  %129 = vmatpush.bf16.msra.mxu0 %v110
  %130 = vmatpush.bf16.msra.mxu0 %v109
  %131 = vmatpush.bf16.msra.mxu0 %v108
  %132 = vmatmul.bf16.gmra.mxu0 %v58
  %v133 = vpop.f32.mrf.mxu0
  %v134 = vadd.f32 0.0, %v133
  %v135 = vpop.f32.mrf.mxu0
  %v136 = vadd.f32 0.0, %v135
  %137 = vdwg.mxu0
  %v138 = vmul.f32 %v134, %v134
  %v139 = vmul.f32 %v136, %v136
  %142 = vrot.lane.b32.xlu0 %v134, 96
  %v143 = vpop.permute.xlu0 %142
  %144 = vrot.lane.b32.xlu0 %v136, 96
  %v145 = vpop.permute.xlu0 %144
  %v148 = vsub.f32 %v138, %v143
  %v149 = vsub.f32 %v139, %v145
  %v150 = vmul.f32 %v148, 0.5
  %v151 = vmul.f32 %v149, 0.5
  %v152 = vpack.c.bf16 %v151, %v150
  %v153 = vld [vmem:[%s2] sm:$0xf]
  %v154 = vld [vmem:[%s2 + $0x4] sm:$0xf]
  %v155 = vld [vmem:[%s2 + $0x8] sm:$0xf]
  %v156 = vld [vmem:[%s2 + $0xc] sm:$0xf]
  %v157 = vld [vmem:[%s3] sm:$0x1]
  %v159 = vperm.slane %v157, 0
  %v165 = vunpack.c.l.b16 %v153
  %v166 = vunpack.c.l.b16 %v154
  %v167 = vunpack.c.l.b16 %v155
  %v168 = vunpack.c.l.b16 %v156
  %v169 = vpack.c.b16 %v166, %v165
  %v170 = vpack.c.b16 %v168, %v167
  %vm173 = vcmask 261120
  %v175 = vsel %vm173, %v152, 0
  %177 = vmatpush.bf16.msra.mxu0 0
  %178 = vmatpush.bf16.msra.mxu0 0
  %179 = vmatpush.bf16.msra.mxu0 0
  %180 = vmatpush.bf16.msra.mxu0 0
  %181 = vmatpush.bf16.msra.mxu0 0
  %182 = vmatpush.bf16.msra.mxu0 0
  %183 = vmatpush.bf16.msra.mxu0 %v170
  %184 = vmatpush.bf16.msra.mxu0 %v169
  %185 = vmatmul.bf16.gmra.mxu0 %v175
  %v186 = vpop.f32.mrf.mxu0
  %v187 = vadd.f32 %v159, %v186
  %v188 = vpop.f32.mrf.mxu0
  %v189 = vadd.f32 %v159, %v188
  %190 = vdwg.mxu0
  %v191 = vmax.f32 %v187, 0.0
  %v192 = vmax.f32 %v189, 0.0
  %v193 = vpack.c.bf16 %v192, %v191
  %v194 = vld [vmem:[%s4] sm:$0xf]
  %v195 = vld [vmem:[%s4 + $0x4] sm:$0xf]
  %v196 = vld [vmem:[%s4 + $0x8] sm:$0xf]
  %v197 = vld [vmem:[%s4 + $0xc] sm:$0xf]
  %v198 = vld [vmem:[%s5] sm:$0x1]
  %v200 = vperm.slane %v198, 0
  %v206 = vunpack.c.l.b16 %v194
  %v207 = vunpack.c.l.b16 %v195
  %v208 = vunpack.c.l.b16 %v196
  %v209 = vunpack.c.l.b16 %v197
  %v210 = vpack.c.b16 %v207, %v206
  %v211 = vpack.c.b16 %v209, %v208
  %v215 = vsel %vm173, %v193, 0
  %217 = vmatpush.bf16.msra.mxu0 0
  %218 = vmatpush.bf16.msra.mxu0 0
  %219 = vmatpush.bf16.msra.mxu0 0
  %220 = vmatpush.bf16.msra.mxu0 0
  %221 = vmatpush.bf16.msra.mxu0 0
  %222 = vmatpush.bf16.msra.mxu0 0
  %223 = vmatpush.bf16.msra.mxu0 %v211
  %224 = vmatpush.bf16.msra.mxu0 %v210
  %225 = vmatmul.bf16.gmra.mxu0 %v215
  %v226 = vpop.f32.mrf.mxu0
  %v227 = vadd.f32 %v200, %v226
  %v228 = vpop.f32.mrf.mxu0
  %v229 = vadd.f32 %v200, %v228
  %230 = vdwg.mxu0
  %v231 = vmax.f32 %v227, 0.0
  %v232 = vmax.f32 %v229, 0.0
  %v233 = vld [vmem:[%s6] sm:$0x1]
  %v235 = vperm.slane %v233, 0
  %v237 = vmul.f32 %v231, %v235
  %v238 = vmul.f32 %v232, %v235
  %vm239 = vcmask 130048
  %v240 = vsel %vm239, %v237, 0.0
  %241 = vadd.xlane.f32.xlu0 %v240
  %v242 = vpop.xlane.xlu0 %241
  %v243 = vsel %vm239, %v238, 0.0
  %244 = vadd.xlane.f32.xlu0 %v243
  %v245 = vpop.xlane.xlu0 %244
  %v246 = vld [vmem:[%s7] sm:$0x1]
  %v248 = vperm.slane %v246, 0
  %v250 = vmul.f32 %v37, %v248
  %v251 = vmul.f32 %v38, %v248
  %v252 = vsel %vm55, %v250, 0.0
  %253 = vadd.xlane.f32.xlu0 %v252
  %v254 = vpop.xlane.xlu0 %253
  %v255 = vsel %vm55, %v251, 0.0
  %256 = vadd.xlane.f32.xlu0 %v255
  %v257 = vpop.xlane.xlu0 %256
  %v258 = vadd.f32 %v242, %v254
  %v259 = vadd.f32 %v245, %v257
  %v260 = vld [vmem:[#allocation2] sm:$0x1]
  %v262 = vperm.slane %v260, 0
  %v264 = vadd.f32 %v258, %v262
  %v265 = vadd.f32 %v259, %v262
  %vm266 = vcmask 7168
  %267 = vst.msk [vmem:[%s9] sm:$0xff] %vm266, %v264
  %268 = vst.msk [vmem:[%s9 + $0x8] sm:$0xff] %vm266, %v265
  // Predicated region
  $region38: #{nfm_calc_score.1} parent=0 // pred_check
    _
  $region39: #{nfm_calc_score.1} parent=0 // pred_check_branch
    %270 = sbr.rel (0) target = $region41
  $region40: #{nfm_calc_score.1} parent=0 // pred_region
    _
  $region41: #{nfm_calc_score.1} parent=0 // pred_fallthru
    _
  // Predicated region
  $region42: #{nfm_calc_score.1} parent=0 // pred_check
    _
  $region43: #{nfm_calc_score.1} parent=0 // pred_check_branch
    %272 = sbr.rel (0) target = $region45
  $region44: #{nfm_calc_score.1} parent=0 // pred_region
    _
  $region45: #{nfm_calc_score.1} parent=0 // pred_fallthru
    _

</llo_original>
